<compile_context>
chip_gen: v7x
topology: tpu7x:2x2x1
jax: 0.10.0
libtpu: 0.0.40
codegen_flags: <defaults>
</compile_context>

<pallas_src>
import jax
import jax.numpy as jnp
from jax.experimental import pallas as pl
from jax.experimental.pallas import tpu as pltpu


NUM_LAYERS = 5   # initial_conv + conv1..conv4, each followed by ReLU
PAD = 128        # lane-dense padded feature width (one full lane tile / MXU tile on v5e)


# ----------------------------------------------------------------------------
# Pallas kernel: the entire 5-layer GCN stack, VMEM-resident, lane-dense.
# Refs: x (N, PAD) f32, adj (N, N) f32, w_stack (5, PAD, PAD) bf16,
#       b_stack (5, 1, PAD) f32, out (N, PAD) f32.
# ----------------------------------------------------------------------------
def _gcn_stack_kernel(x_ref, adj_ref, w_ref, b_ref, out_ref):
    a = adj_ref[...].astype(jnp.bfloat16)   # (N, N) normalized adjacency, bf16 for MXU
    h = x_ref[...]                          # (N, PAD) f32 activations

    for l in range(NUM_LAYERS):             # static unroll: 5 layers, 10 MXU matmuls
        # GCNConv dense form: A_norm @ (H @ W) + b, then fused ReLU.
        hw = jnp.dot(h.astype(jnp.bfloat16), w_ref[l],
                     preferred_element_type=jnp.float32)          # (N, PAD) f32 acc
        agg = jnp.dot(a, hw.astype(jnp.bfloat16),
                      preferred_element_type=jnp.float32) + b_ref[l]
        h = jnp.maximum(agg, 0.0)                                  # f32 VPU ReLU

    out_ref[...] = h


def conv_gnn_forward(x_padded, adj_norm, w_stack, b_stack):
    """Fused 5-layer GCN stack on padded inputs. Returns (N, PAD) f32 (slice outside)."""
    n = x_padded.shape[0]
    vmem = pl.BlockSpec(memory_space=pltpu.MemorySpace.VMEM)
    return pl.pallas_call(
        _gcn_stack_kernel,
        out_shape=jax.ShapeDtypeStruct((n, PAD), jnp.float32),
        in_specs=[vmem, vmem, vmem, vmem],
        out_specs=vmem,
    )(x_padded, adj_norm, w_stack, b_stack)


# ----------------------------------------------------------------------------
# Plain-JAX glue: dense symmetric GCN normalization (PyG gcn_norm equivalent).
# ----------------------------------------------------------------------------
def dense_gcn_norm(edge_index, num_nodes):
    src, dst = edge_index[0], edge_index[1]   # PyG convention: row0=source j, row1=target i
    adj = jnp.zeros((num_nodes, num_nodes), jnp.float32).at[dst, src].add(1.0)
    # add_remaining_self_loops(fill_value=1): only where no self-loop exists
    diag = jnp.diagonal(adj)
    adj = adj + jnp.diag(jnp.where(diag == 0.0, 1.0, 0.0))
    deg = jnp.sum(adj, axis=1)                # in-degree incl. self-loop
    dinv = jnp.where(deg > 0.0, 1.0 / jnp.sqrt(deg), 0.0)
    return adj * dinv[:, None] * dinv[None, :]


# ----------------------------------------------------------------------------
# Parameters (glorot weight / zero bias, matching PyG GCNConv defaults).
# ----------------------------------------------------------------------------
def _glorot(key, fan_in, fan_out):
    bound = (6.0 / (fan_in + fan_out)) ** 0.5
    return jax.random.uniform(key, (fan_in, fan_out), jnp.float32, -bound, bound)


class ConvGNN:
    """JAX/Pallas equivalent of CONV_GNN: 5 GCNConv layers, each followed by ReLU."""

    def __init__(self, key, node_features, embedding_size_reduced):
        assert node_features <= PAD and embedding_size_reduced <= PAD
        self.node_features = node_features
        self.emb = embedding_size_reduced
        keys = jax.random.split(key, NUM_LAYERS)
        dims_in = [node_features] + [embedding_size_reduced] * (NUM_LAYERS - 1)

        # Stacked, zero-padded, lane-dense weights (bf16 to halve DMA bytes; MXU-native).
        w_stack = jnp.zeros((NUM_LAYERS, PAD, PAD), jnp.float32)
        for i in range(NUM_LAYERS):
            w = _glorot(keys[i], dims_in[i], embedding_size_reduced)
            w_stack = w_stack.at[i, :dims_in[i], :embedding_size_reduced].set(w)
        self.w_stack = w_stack.astype(jnp.bfloat16)
        # PyG GCNConv bias initializes to zeros; padded lanes are zero by construction.
        self.b_stack = jnp.zeros((NUM_LAYERS, 1, PAD), jnp.float32)

    def _pad_x(self, x):
        n = x.shape[0]
        return jnp.zeros((n, PAD), jnp.float32).at[:, : self.node_features].set(x)

    def __call__(self, x, adj_norm):
        out_padded = conv_gnn_forward(self._pad_x(x), adj_norm, self.w_stack, self.b_stack)
        return out_padded[:, : self.emb]

    def reference_bf16(self, x, adj_norm):
        """Pure-JAX reference mirroring the kernel math (bf16 MXU operands, f32 acc)."""
        a = adj_norm.astype(jnp.bfloat16)
        h = self._pad_x(x)
        for l in range(NUM_LAYERS):
            hw = jnp.dot(h.astype(jnp.bfloat16), self.w_stack[l],
                         preferred_element_type=jnp.float32)
            agg = jnp.dot(a, hw.astype(jnp.bfloat16),
                          preferred_element_type=jnp.float32) + self.b_stack[l]
            h = jnp.maximum(agg, 0.0)
        return h[:, : self.emb]

    def reference_f32(self, x, adj_norm):
        """Unpadded full-f32 reference (sanity check on the bf16 approximation)."""
        h = x
        for l in range(NUM_LAYERS):
            din = self.node_features if l == 0 else self.emb
            w = self.w_stack[l, :din, : self.emb].astype(jnp.float32)
            b = self.b_stack[l, :, : self.emb]
            h = jnp.maximum(adj_norm @ (h @ w) + b, 0.0)
        return h


if __name__ == "__main__":
    N = 16          # number of nodes
    NODE_F = 16     # node_features
    EMB = 32        # embedding_size_reduced

    key = jax.random.PRNGKey(0)
    kx, _ = jax.random.split(key)

    # Example graph: bidirectional ring (every node has incoming edges).
    x = jax.random.normal(kx, (N, NODE_F), jnp.float32)
    idx = jnp.arange(N)
    src = jnp.concatenate([idx, (idx + 1) % N])
    dst = jnp.concatenate([(idx + 1) % N, idx])
    edge_index = jnp.stack([src, dst])               # (2, E), PyG convention

    adj_norm = dense_gcn_norm(edge_index, N)

    model = ConvGNN(jax.random.PRNGKey(42), NODE_F, EMB)
    out = jax.block_until_ready(model(x, adj_norm))

    assert out.shape == (N, EMB), out.shape
    assert bool(jnp.all(jnp.isfinite(out)))

    # Exact-ish check vs. a JAX reference using the identical bf16-operand math.
    ref = model.reference_bf16(x, adj_norm)
    assert bool(jnp.allclose(out, ref, rtol=1e-4, atol=1e-4)), "mismatch vs bf16 reference"

    # Loose sanity check vs. the pure-f32 GCN math (documents bf16 MXU tolerance).
    ref32 = model.reference_f32(x, adj_norm)
    assert bool(jnp.allclose(out, ref32, rtol=3e-2, atol=3e-2)), "mismatch vs f32 reference"

    print("KERNEL_OK")
</pallas_src>

<mosaic_0001>
module attributes {stable_mosaic.version = 11 : i64} {
  func.func @_gcn_stack_kernel(%arg0: memref<16x128xf32, #tpu.memory_space<vmem>>, %arg1: memref<16x16xf32, #tpu.memory_space<vmem>>, %arg2: memref<5x128x128xbf16, #tpu.memory_space<vmem>>, %arg3: memref<5x1x128xf32, #tpu.memory_space<vmem>>, %arg4: memref<16x128xf32, #tpu.memory_space<vmem>>) attributes {dimension_semantics = [], scalar_prefetch = 0 : i64, scratch_operands = 0 : i64, tpu.core_type = #tpu.core_type<tc>} {
    %c0 = arith.constant 0 : index
    %c0_0 = arith.constant 0 : index
    %0 = vector.load %arg1[%c0, %c0_0] : memref<16x16xf32, #tpu.memory_space<vmem>>, vector<16x16xf32>
    %1 = arith.truncf %0 : vector<16x16xf32> to vector<16x16xbf16>
    %c0_1 = arith.constant 0 : index
    %c0_2 = arith.constant 0 : index
    %2 = vector.load %arg0[%c0_1, %c0_2] : memref<16x128xf32, #tpu.memory_space<vmem>>, vector<16x128xf32>
    %3 = arith.truncf %2 : vector<16x128xf32> to vector<16x128xbf16>
    %c0_3 = arith.constant 0 : index
    %c0_4 = arith.constant 0 : index
    %c0_5 = arith.constant 0 : index
    %4 = vector.load %arg2[%c0_3, %c0_4, %c0_5] : memref<5x128x128xbf16, #tpu.memory_space<vmem>>, vector<1x128x128xbf16>
    %5 = vector.shape_cast %4 : vector<1x128x128xbf16> to vector<128x128xbf16>
    %cst = arith.constant dense<0.000000e+00> : vector<16x128xf32>
    %6 = tpu.matmul %3, %5, %cst {dimension_numbers = #tpu.dot_dimension_numbers<[1], [0], [0], [1], [0, 0, 1, 1], [], []>} : vector<16x128xbf16>, vector<128x128xbf16>, vector<16x128xf32> -> vector<16x128xf32>
    %7 = arith.truncf %6 : vector<16x128xf32> to vector<16x128xbf16>
    %cst_6 = arith.constant dense<0.000000e+00> : vector<16x128xf32>
    %8 = tpu.matmul %1, %7, %cst_6 {dimension_numbers = #tpu.dot_dimension_numbers<[1], [0], [0], [1], [0, 0, 1, 1], [], []>} : vector<16x16xbf16>, vector<16x128xbf16>, vector<16x128xf32> -> vector<16x128xf32>
    %c0_7 = arith.constant 0 : index
    %c0_8 = arith.constant 0 : index
    %c0_9 = arith.constant 0 : index
    %9 = vector.load %arg3[%c0_7, %c0_8, %c0_9] : memref<5x1x128xf32, #tpu.memory_space<vmem>>, vector<1x1x128xf32>
    %10 = vector.shape_cast %9 : vector<1x1x128xf32> to vector<1x128xf32>
    %11 = vector.broadcast %10 : vector<1x128xf32> to vector<16x128xf32>
    %12 = arith.addf %8, %11 : vector<16x128xf32>
    %cst_10 = arith.constant 0.000000e+00 : f32
    %13 = vector.broadcast %cst_10 : f32 to vector<16x128xf32>
    %14 = arith.maximumf %12, %13 : vector<16x128xf32>
    %15 = arith.truncf %14 : vector<16x128xf32> to vector<16x128xbf16>
    %c1 = arith.constant 1 : index
    %c0_11 = arith.constant 0 : index
    %c0_12 = arith.constant 0 : index
    %16 = vector.load %arg2[%c1, %c0_11, %c0_12] : memref<5x128x128xbf16, #tpu.memory_space<vmem>>, vector<1x128x128xbf16>
    %17 = vector.shape_cast %16 : vector<1x128x128xbf16> to vector<128x128xbf16>
    %cst_13 = arith.constant dense<0.000000e+00> : vector<16x128xf32>
    %18 = tpu.matmul %15, %17, %cst_13 {dimension_numbers = #tpu.dot_dimension_numbers<[1], [0], [0], [1], [0, 0, 1, 1], [], []>} : vector<16x128xbf16>, vector<128x128xbf16>, vector<16x128xf32> -> vector<16x128xf32>
    %19 = arith.truncf %18 : vector<16x128xf32> to vector<16x128xbf16>
    %cst_14 = arith.constant dense<0.000000e+00> : vector<16x128xf32>
    %20 = tpu.matmul %1, %19, %cst_14 {dimension_numbers = #tpu.dot_dimension_numbers<[1], [0], [0], [1], [0, 0, 1, 1], [], []>} : vector<16x16xbf16>, vector<16x128xbf16>, vector<16x128xf32> -> vector<16x128xf32>
    %c1_15 = arith.constant 1 : index
    %c0_16 = arith.constant 0 : index
    %c0_17 = arith.constant 0 : index
    %21 = vector.load %arg3[%c1_15, %c0_16, %c0_17] : memref<5x1x128xf32, #tpu.memory_space<vmem>>, vector<1x1x128xf32>
    %22 = vector.shape_cast %21 : vector<1x1x128xf32> to vector<1x128xf32>
    %23 = vector.broadcast %22 : vector<1x128xf32> to vector<16x128xf32>
    %24 = arith.addf %20, %23 : vector<16x128xf32>
    %cst_18 = arith.constant 0.000000e+00 : f32
    %25 = vector.broadcast %cst_18 : f32 to vector<16x128xf32>
    %26 = arith.maximumf %24, %25 : vector<16x128xf32>
    %27 = arith.truncf %26 : vector<16x128xf32> to vector<16x128xbf16>
    %c2 = arith.constant 2 : index
    %c0_19 = arith.constant 0 : index
    %c0_20 = arith.constant 0 : index
    %28 = vector.load %arg2[%c2, %c0_19, %c0_20] : memref<5x128x128xbf16, #tpu.memory_space<vmem>>, vector<1x128x128xbf16>
    %29 = vector.shape_cast %28 : vector<1x128x128xbf16> to vector<128x128xbf16>
    %cst_21 = arith.constant dense<0.000000e+00> : vector<16x128xf32>
    %30 = tpu.matmul %27, %29, %cst_21 {dimension_numbers = #tpu.dot_dimension_numbers<[1], [0], [0], [1], [0, 0, 1, 1], [], []>} : vector<16x128xbf16>, vector<128x128xbf16>, vector<16x128xf32> -> vector<16x128xf32>
    %31 = arith.truncf %30 : vector<16x128xf32> to vector<16x128xbf16>
    %cst_22 = arith.constant dense<0.000000e+00> : vector<16x128xf32>
    %32 = tpu.matmul %1, %31, %cst_22 {dimension_numbers = #tpu.dot_dimension_numbers<[1], [0], [0], [1], [0, 0, 1, 1], [], []>} : vector<16x16xbf16>, vector<16x128xbf16>, vector<16x128xf32> -> vector<16x128xf32>
    %c2_23 = arith.constant 2 : index
    %c0_24 = arith.constant 0 : index
    %c0_25 = arith.constant 0 : index
    %33 = vector.load %arg3[%c2_23, %c0_24, %c0_25] : memref<5x1x128xf32, #tpu.memory_space<vmem>>, vector<1x1x128xf32>
    %34 = vector.shape_cast %33 : vector<1x1x128xf32> to vector<1x128xf32>
    %35 = vector.broadcast %34 : vector<1x128xf32> to vector<16x128xf32>
    %36 = arith.addf %32, %35 : vector<16x128xf32>
    %cst_26 = arith.constant 0.000000e+00 : f32
    %37 = vector.broadcast %cst_26 : f32 to vector<16x128xf32>
    %38 = arith.maximumf %36, %37 : vector<16x128xf32>
    %39 = arith.truncf %38 : vector<16x128xf32> to vector<16x128xbf16>
    %c3 = arith.constant 3 : index
    %c0_27 = arith.constant 0 : index
    %c0_28 = arith.constant 0 : index
    %40 = vector.load %arg2[%c3, %c0_27, %c0_28] : memref<5x128x128xbf16, #tpu.memory_space<vmem>>, vector<1x128x128xbf16>
    %41 = vector.shape_cast %40 : vector<1x128x128xbf16> to vector<128x128xbf16>
    %cst_29 = arith.constant dense<0.000000e+00> : vector<16x128xf32>
    %42 = tpu.matmul %39, %41, %cst_29 {dimension_numbers = #tpu.dot_dimension_numbers<[1], [0], [0], [1], [0, 0, 1, 1], [], []>} : vector<16x128xbf16>, vector<128x128xbf16>, vector<16x128xf32> -> vector<16x128xf32>
    %43 = arith.truncf %42 : vector<16x128xf32> to vector<16x128xbf16>
    %cst_30 = arith.constant dense<0.000000e+00> : vector<16x128xf32>
    %44 = tpu.matmul %1, %43, %cst_30 {dimension_numbers = #tpu.dot_dimension_numbers<[1], [0], [0], [1], [0, 0, 1, 1], [], []>} : vector<16x16xbf16>, vector<16x128xbf16>, vector<16x128xf32> -> vector<16x128xf32>
    %c3_31 = arith.constant 3 : index
    %c0_32 = arith.constant 0 : index
    %c0_33 = arith.constant 0 : index
    %45 = vector.load %arg3[%c3_31, %c0_32, %c0_33] : memref<5x1x128xf32, #tpu.memory_space<vmem>>, vector<1x1x128xf32>
    %46 = vector.shape_cast %45 : vector<1x1x128xf32> to vector<1x128xf32>
    %47 = vector.broadcast %46 : vector<1x128xf32> to vector<16x128xf32>
    %48 = arith.addf %44, %47 : vector<16x128xf32>
    %cst_34 = arith.constant 0.000000e+00 : f32
    %49 = vector.broadcast %cst_34 : f32 to vector<16x128xf32>
    %50 = arith.maximumf %48, %49 : vector<16x128xf32>
    %51 = arith.truncf %50 : vector<16x128xf32> to vector<16x128xbf16>
    %c4 = arith.constant 4 : index
    %c0_35 = arith.constant 0 : index
    %c0_36 = arith.constant 0 : index
    %52 = vector.load %arg2[%c4, %c0_35, %c0_36] : memref<5x128x128xbf16, #tpu.memory_space<vmem>>, vector<1x128x128xbf16>
    %53 = vector.shape_cast %52 : vector<1x128x128xbf16> to vector<128x128xbf16>
    %cst_37 = arith.constant dense<0.000000e+00> : vector<16x128xf32>
    %54 = tpu.matmul %51, %53, %cst_37 {dimension_numbers = #tpu.dot_dimension_numbers<[1], [0], [0], [1], [0, 0, 1, 1], [], []>} : vector<16x128xbf16>, vector<128x128xbf16>, vector<16x128xf32> -> vector<16x128xf32>
    %55 = arith.truncf %54 : vector<16x128xf32> to vector<16x128xbf16>
    %cst_38 = arith.constant dense<0.000000e+00> : vector<16x128xf32>
    %56 = tpu.matmul %1, %55, %cst_38 {dimension_numbers = #tpu.dot_dimension_numbers<[1], [0], [0], [1], [0, 0, 1, 1], [], []>} : vector<16x16xbf16>, vector<16x128xbf16>, vector<16x128xf32> -> vector<16x128xf32>
    %c4_39 = arith.constant 4 : index
    %c0_40 = arith.constant 0 : index
    %c0_41 = arith.constant 0 : index
    %57 = vector.load %arg3[%c4_39, %c0_40, %c0_41] : memref<5x1x128xf32, #tpu.memory_space<vmem>>, vector<1x1x128xf32>
    %58 = vector.shape_cast %57 : vector<1x1x128xf32> to vector<1x128xf32>
    %59 = vector.broadcast %58 : vector<1x128xf32> to vector<16x128xf32>
    %60 = arith.addf %56, %59 : vector<16x128xf32>
    %cst_42 = arith.constant 0.000000e+00 : f32
    %61 = vector.broadcast %cst_42 : f32 to vector<16x128xf32>
    %62 = arith.maximumf %60, %61 : vector<16x128xf32>
    %c0_43 = arith.constant 0 : index
    %c0_44 = arith.constant 0 : index
    %63 = vector.load %arg4[%c0_43, %c0_44] : memref<16x128xf32, #tpu.memory_space<vmem>>, vector<16x128xf32>
    tpu.vector_store %arg4[%c0_43, %c0_44], %62 {strides = array<i32>} : memref<16x128xf32, #tpu.memory_space<vmem>>, vector<16x128xf32>,
    return
  }
}

</mosaic_0001>

<llo_original>
// kernel: tpu_custom_call.1
$region0: #{tpu_custom_call.1}
  #allocation0 [shape = 'u32[]', space=smem, size = 0x4, offset = 0x4, fixed_abs, tag = 'smem constant byte address 0x4 - core index']
  #allocation1 [shape = 'u32[144,128]{1,0:T(1,128)}', space=vmem, size = 0x12000, scoped, tag = 'internal scratch']
  %s0 = inlined_call_operand.hbm [shape: f32[16,128], index: 0, kind: input, shape index: {}]
  %s1 = inlined_call_operand.hbm [shape: f32[16,16], index: 1, kind: input, shape index: {}]
  %s2 = inlined_call_operand.hbm [shape: bf16[5,128,128], index: 2, kind: input, shape index: {}]
  %s3 = inlined_call_operand.vmem [shape: f32[5,1,128], index: 3, kind: input, shape index: {}]
  %s4 = inlined_call_operand.hbm [shape: f32[16,128], index: 4, kind: output, shape index: {}]
  %s5 = sld [smem:[#allocation0]]
  $region38: #{tpu_custom_call.1} parent=0
    _
  %s7 = ssub.s32 1, %s5
  %s8 = scalar_select 0, %s7, %s5
  $region1: #{tpu_custom_call.1} parent=0
    #allocation2 [shape = 'u8[8192]{0}', space=vmem, size = 0x2000, scoped, tag = 'input window, operand 0, single buffered']
    #allocation3 [shape = 's32[1]{0}', space=sflag, size = 0x4, scoped, tag = 'scoped memory for tpu_custom_call.1']
    #allocation4 [shape = 's32[1]{0}', space=sflag, size = 0x4, scoped, tag = 'scoped memory for tpu_custom_call.1']
    #allocation5 [shape = 'u8[8192]{0}', space=vmem, size = 0x2000, scoped, tag = 'input window, operand 1, single buffered']
    #allocation6 [shape = 's32[1]{0}', space=sflag, size = 0x4, scoped, tag = 'scoped memory for tpu_custom_call.1']
    #allocation7 [shape = 'u8[163840]{0}', space=vmem, size = 0x28000, scoped, tag = 'input window, operand 2, single buffered']
    #allocation8 [shape = 'u8[8192]{0}', space=vmem, size = 0x2000, scoped, tag = 'output window, operand 0, single buffered']
    %9 = vsyncpa [#allocation3], 0
    %10 = vsyncpa [#allocation6], 0
    %11 = vsyncpa [#allocation4], 0
    // Predicated region
    $region2: #{tpu_custom_call.1} parent=1 // pred_check
      _
    $region3: #{tpu_custom_call.1} parent=1 // pred_check_branch
      %13 = sbr.rel (0) target = $region5
    $region4: #{tpu_custom_call.1} parent=1 // pred_region
      %s15 = ssub.s32 256, 256
      %16 = vsyncadd [#allocation3], %s15
      %s17 = sshll.u32 [#allocation2], 4
      %s18 = int_to_ptr.vmem [resolvable:$true] %s17
      %23 = dma.hbm_to_vmem [thread:$0]  %s0, 256, %s18, [#allocation3], 128, 128, 8
    $region5: #{tpu_custom_call.1} parent=1 // pred_fallthru
      _
    // Predicated region
    $region6: #{tpu_custom_call.1} parent=1 // pred_check
      _
    $region7: #{tpu_custom_call.1} parent=1 // pred_check_branch
      %25 = sbr.rel (0) target = $region9
    $region8: #{tpu_custom_call.1} parent=1 // pred_region
      %s27 = ssub.s32 256, 256
      %28 = vsyncadd [#allocation6], %s27
      %s29 = sshll.u32 [#allocation5], 4
      %s30 = int_to_ptr.vmem [resolvable:$true] %s29
      %35 = dma.hbm_to_vmem [thread:$0]  %s1, 256, %s30, [#allocation6], 128, 128, 8
    $region9: #{tpu_custom_call.1} parent=1 // pred_fallthru
      _
    // Predicated region
    $region10: #{tpu_custom_call.1} parent=1 // pred_check
      _
    $region11: #{tpu_custom_call.1} parent=1 // pred_check_branch
      %37 = sbr.rel (0) target = $region13
    $region12: #{tpu_custom_call.1} parent=1 // pred_region
      %s39 = ssub.s32 5120, 5120
      %40 = vsyncadd [#allocation6], %s39
      %s41 = sshll.u32 [#allocation7], 4
      %s42 = int_to_ptr.vmem [resolvable:$true] %s41
      %47 = dma.hbm_to_vmem [thread:$0]  %s2, 5120, %s42, [#allocation6], 64, 64, 4
    $region13: #{tpu_custom_call.1} parent=1 // pred_fallthru
      _
    // Predicated region
    $region14: #{tpu_custom_call.1} parent=1 // pred_check
      _
    $region15: #{tpu_custom_call.1} parent=1 // pred_check_branch
      %49 = sbr.rel (0) target = $region17
    $region16: #{tpu_custom_call.1} parent=1 // pred_region
      _
    $region17: #{tpu_custom_call.1} parent=1 // pred_fallthru
      _
    // Predicated region
    $region18: #{tpu_custom_call.1} parent=1 // pred_check
      _
    $region19: #{tpu_custom_call.1} parent=1 // pred_check_branch
      %51 = sbr.rel (0) target = $region21
    $region20: #{tpu_custom_call.1} parent=1 // pred_region
      %52 = dma.done [#allocation3], 256
    $region21: #{tpu_custom_call.1} parent=1 // pred_fallthru
      _
    // Predicated region
    $region22: #{tpu_custom_call.1} parent=1 // pred_check
      _
    $region23: #{tpu_custom_call.1} parent=1 // pred_check_branch
      %54 = sbr.rel (0) target = $region25
    $region24: #{tpu_custom_call.1} parent=1 // pred_region
      %55 = dma.done [#allocation6], 256
    $region25: #{tpu_custom_call.1} parent=1 // pred_fallthru
      _
    // Predicated region
    $region26: #{tpu_custom_call.1} parent=1 // pred_check
      _
    $region27: #{tpu_custom_call.1} parent=1 // pred_check_branch
      %57 = sbr.rel (0) target = $region29
    $region28: #{tpu_custom_call.1} parent=1 // pred_region
      %58 = dma.done [#allocation6], 5120
    $region29: #{tpu_custom_call.1} parent=1 // pred_fallthru
      _
    %v60 = vld [vmem:[#allocation5] sm:$0xff]
    %v61 = vld [vmem:[#allocation5 + $0x8] sm:$0xff]
    %v62 = vpack.c.bf16 %v61, %v60
    %v63 = vld [vmem:[#allocation2] sm:$0xff]
    %v64 = vld [vmem:[#allocation2 + $0x8] sm:$0xff]
    %v65 = vpack.c.bf16 %v64, %v63
    %v66 = vld [vmem:[#allocation7] sm:$0xf]
    %v67 = vld [vmem:[#allocation7 + $0x4] sm:$0xf]
    %v68 = vld [vmem:[#allocation7 + $0x8] sm:$0xf]
    %v69 = vld [vmem:[#allocation7 + $0xc] sm:$0xf]
    %v70 = vld [vmem:[#allocation7 + $0x10] sm:$0xf]
    %v71 = vld [vmem:[#allocation7 + $0x14] sm:$0xf]
    %v72 = vld [vmem:[#allocation7 + $0x18] sm:$0xf]
    %v73 = vld [vmem:[#allocation7 + $0x1c] sm:$0xf]
    %v74 = vld [vmem:[#allocation7 + $0x20] sm:$0xf]
    %v75 = vld [vmem:[#allocation7 + $0x24] sm:$0xf]
    %v76 = vld [vmem:[#allocation7 + $0x28] sm:$0xf]
    %v77 = vld [vmem:[#allocation7 + $0x2c] sm:$0xf]
    %v78 = vld [vmem:[#allocation7 + $0x30] sm:$0xf]
    %v79 = vld [vmem:[#allocation7 + $0x34] sm:$0xf]
    %v80 = vld [vmem:[#allocation7 + $0x38] sm:$0xf]
    %v81 = vld [vmem:[#allocation7 + $0x3c] sm:$0xf]
    %v98 = vunpack.c.l.b16 %v66
    %v99 = vunpack.c.l.b16 %v67
    %v100 = vunpack.c.l.b16 %v68
    %v101 = vunpack.c.l.b16 %v69
    %v102 = vunpack.c.l.b16 %v70
    %v103 = vunpack.c.l.b16 %v71
    %v104 = vunpack.c.l.b16 %v72
    %v105 = vunpack.c.l.b16 %v73
    %v106 = vunpack.c.l.b16 %v74
    %v107 = vunpack.c.l.b16 %v75
    %v108 = vunpack.c.l.b16 %v76
    %v109 = vunpack.c.l.b16 %v77
    %v110 = vunpack.c.l.b16 %v78
    %v111 = vunpack.c.l.b16 %v79
    %v112 = vunpack.c.l.b16 %v80
    %v113 = vunpack.c.l.b16 %v81
    %v114 = vpack.c.b16 %v99, %v98
    %v115 = vpack.c.b16 %v101, %v100
    %v116 = vpack.c.b16 %v103, %v102
    %v117 = vpack.c.b16 %v105, %v104
    %v118 = vpack.c.b16 %v107, %v106
    %v119 = vpack.c.b16 %v109, %v108
    %v120 = vpack.c.b16 %v111, %v110
    %v121 = vpack.c.b16 %v113, %v112
    %130 = vmatprep.subr.bf16.mxu0 0
    %131 = vmatpush1.bf16.msra.mxu0 %v114
    %132 = vmatprep.subr.bf16.mxu0 0
    %133 = vmatpush1.bf16.msra.mxu0 %v115
    %134 = vmatprep.subr.bf16.mxu0 0
    %135 = vmatpush1.bf16.msra.mxu0 %v116
    %136 = vmatprep.subr.bf16.mxu0 0
    %137 = vmatpush1.bf16.msra.mxu0 %v117
    %138 = vmatprep.subr.bf16.mxu0 0
    %139 = vmatpush1.bf16.msra.mxu0 %v118
    %140 = vmatprep.subr.bf16.mxu0 0
    %141 = vmatpush1.bf16.msra.mxu0 %v119
    %142 = vmatprep.subr.bf16.mxu0 0
    %143 = vmatpush1.bf16.msra.mxu0 %v120
    %144 = vmatprep.subr.bf16.mxu0 0
    %145 = vmatpush1.bf16.msra.mxu0 %v121
    %146 = vmatprep.subr.bf16.mxu0 0
    %147 = vmatpush1.bf16.msra.mxu0 0
    %148 = vmatprep.subr.bf16.mxu0 0
    %149 = vmatpush1.bf16.msra.mxu0 0
    %150 = vmatprep.subr.bf16.mxu0 0
    %151 = vmatpush1.bf16.msra.mxu0 0
    %152 = vmatprep.subr.bf16.mxu0 0
    %153 = vmatpush1.bf16.msra.mxu0 0
    %154 = vmatprep.subr.bf16.mxu0 0
    %155 = vmatpush1.bf16.msra.mxu0 0
    %156 = vmatprep.subr.bf16.mxu0 0
    %157 = vmatpush1.bf16.msra.mxu0 0
    %158 = vmatprep.subr.bf16.mxu0 0
    %159 = vmatpush1.bf16.msra.mxu0 0
    %160 = vmatprep.subr.bf16.mxu0 0
    %161 = vmatpush1.bf16.msra.mxu0 0
    %162 = vmatprep.mubr.bf16.mxu0 0
    %163 = vmatmul.mubr.bf16.gmra.mrb[0].mxu0 %v65
    %v164 = vpop.f32.mrb[0].mxu0
    %v165 = vadd.f32 0.0, %v164
    %v166 = vpop.f32.mrb[0].mxu0
    %v167 = vpop.f32.mrb[0].mxu0
    %v168 = vadd.f32 0.0, %v167
    %v169 = vpop.f32.mrb[0].mxu0
    %170 = vdwg.mxu0
    %v171 = vpack.c.bf16 %v168, %v165
    %v172 = vld [vmem:[%s3] sm:$0x1]
    %v174 = vlaneseq
    %v175 = vshrl.u32 %v174, 7
    %v176 = vsub.s32 0, %v175
    %v177 = vrot.slane %v172, %v176
    %vm179 = vcmask 130048
    %v181 = vsel %vm179, %v62, 0
    %183 = vmatprep.subr.bf16.mxu0 0
    %184 = vmatpush1.bf16.msra.mxu0 %v171
    %185 = vmatprep.subr.bf16.mxu0 0
    %186 = vmatpush1.bf16.msra.mxu0 0
    %187 = vmatprep.subr.bf16.mxu0 0
    %188 = vmatpush1.bf16.msra.mxu0 0
    %189 = vmatprep.subr.bf16.mxu0 0
    %190 = vmatpush1.bf16.msra.mxu0 0
    %191 = vmatprep.subr.bf16.mxu0 0
    %192 = vmatpush1.bf16.msra.mxu0 0
    %193 = vmatprep.subr.bf16.mxu0 0
    %194 = vmatpush1.bf16.msra.mxu0 0
    %195 = vmatprep.subr.bf16.mxu0 0
    %196 = vmatpush1.bf16.msra.mxu0 0
    %197 = vmatprep.subr.bf16.mxu0 0
    %198 = vmatpush1.bf16.msra.mxu0 0
    %199 = vmatprep.subr.bf16.mxu0 0
    %200 = vmatpush1.bf16.msra.mxu0 0
    %201 = vmatprep.subr.bf16.mxu0 0
    %202 = vmatpush1.bf16.msra.mxu0 0
    %203 = vmatprep.subr.bf16.mxu0 0
    %204 = vmatpush1.bf16.msra.mxu0 0
    %205 = vmatprep.subr.bf16.mxu0 0
    %206 = vmatpush1.bf16.msra.mxu0 0
    %207 = vmatprep.subr.bf16.mxu0 0
    %208 = vmatpush1.bf16.msra.mxu0 0
    %209 = vmatprep.subr.bf16.mxu0 0
    %210 = vmatpush1.bf16.msra.mxu0 0
    %211 = vmatprep.subr.bf16.mxu0 0
    %212 = vmatpush1.bf16.msra.mxu0 0
    %213 = vmatprep.subr.bf16.mxu0 0
    %214 = vmatpush1.bf16.msra.mxu0 0
    %215 = vmatprep.mubr.bf16.mxu0 0
    %216 = vmatmul.mubr.bf16.gmra.mrb[0].mxu0 %v181
    %v217 = vpop.f32.mrb[0].mxu0
    %v218 = vadd.f32 %v177, %v217
    %v219 = vpop.f32.mrb[0].mxu0
    %v220 = vpop.f32.mrb[0].mxu0
    %v221 = vadd.f32 %v177, %v220
    %v222 = vpop.f32.mrb[0].mxu0
    %223 = vdwg.mxu0
    %v224 = vmax.f32 %v218, 0.0
    %v225 = vmax.f32 %v221, 0.0
    %v226 = vpack.c.bf16 %v225, %v224
    %s227 = scalar_lea.vmem [#allocation7], 64
    %v228 = vld [vmem:[%s227] sm:$0xf]
    %v229 = vld [vmem:[%s227 + $0x4] sm:$0xf]
    %v230 = vld [vmem:[%s227 + $0x8] sm:$0xf]
    %v231 = vld [vmem:[%s227 + $0xc] sm:$0xf]
    %v232 = vld [vmem:[%s227 + $0x10] sm:$0xf]
    %v233 = vld [vmem:[%s227 + $0x14] sm:$0xf]
    %v234 = vld [vmem:[%s227 + $0x18] sm:$0xf]
    %v235 = vld [vmem:[%s227 + $0x1c] sm:$0xf]
    %v236 = vld [vmem:[%s227 + $0x20] sm:$0xf]
    %v237 = vld [vmem:[%s227 + $0x24] sm:$0xf]
    %v238 = vld [vmem:[%s227 + $0x28] sm:$0xf]
    %v239 = vld [vmem:[%s227 + $0x2c] sm:$0xf]
    %v240 = vld [vmem:[%s227 + $0x30] sm:$0xf]
    %v241 = vld [vmem:[%s227 + $0x34] sm:$0xf]
    %v242 = vld [vmem:[%s227 + $0x38] sm:$0xf]
    %v243 = vld [vmem:[%s227 + $0x3c] sm:$0xf]
    %v260 = vunpack.c.l.b16 %v228
    %v261 = vunpack.c.l.b16 %v229
    %v262 = vunpack.c.l.b16 %v230
    %v263 = vunpack.c.l.b16 %v231
    %v264 = vunpack.c.l.b16 %v232
    %v265 = vunpack.c.l.b16 %v233
    %v266 = vunpack.c.l.b16 %v234
    %v267 = vunpack.c.l.b16 %v235
    %v268 = vunpack.c.l.b16 %v236
    %v269 = vunpack.c.l.b16 %v237
    %v270 = vunpack.c.l.b16 %v238
    %v271 = vunpack.c.l.b16 %v239
    %v272 = vunpack.c.l.b16 %v240
    %v273 = vunpack.c.l.b16 %v241
    %v274 = vunpack.c.l.b16 %v242
    %v275 = vunpack.c.l.b16 %v243
    %v276 = vpack.c.b16 %v261, %v260
    %v277 = vpack.c.b16 %v263, %v262
    %v278 = vpack.c.b16 %v265, %v264
    %v279 = vpack.c.b16 %v267, %v266
    %v280 = vpack.c.b16 %v269, %v268
    %v281 = vpack.c.b16 %v271, %v270
    %v282 = vpack.c.b16 %v273, %v272
    %v283 = vpack.c.b16 %v275, %v274
    %292 = vmatprep.subr.bf16.mxu0 0
    %293 = vmatpush1.bf16.msra.mxu0 %v276
    %294 = vmatprep.subr.bf16.mxu0 0
    %295 = vmatpush1.bf16.msra.mxu0 %v277
    %296 = vmatprep.subr.bf16.mxu0 0
    %297 = vmatpush1.bf16.msra.mxu0 %v278
    %298 = vmatprep.subr.bf16.mxu0 0
    %299 = vmatpush1.bf16.msra.mxu0 %v279
    %300 = vmatprep.subr.bf16.mxu0 0
    %301 = vmatpush1.bf16.msra.mxu0 %v280
    %302 = vmatprep.subr.bf16.mxu0 0
    %303 = vmatpush1.bf16.msra.mxu0 %v281
    %304 = vmatprep.subr.bf16.mxu0 0
    %305 = vmatpush1.bf16.msra.mxu0 %v282
    %306 = vmatprep.subr.bf16.mxu0 0
    %307 = vmatpush1.bf16.msra.mxu0 %v283
    %308 = vmatprep.subr.bf16.mxu0 0
    %309 = vmatpush1.bf16.msra.mxu0 0
    %310 = vmatprep.subr.bf16.mxu0 0
    %311 = vmatpush1.bf16.msra.mxu0 0
    %312 = vmatprep.subr.bf16.mxu0 0
    %313 = vmatpush1.bf16.msra.mxu0 0
    %314 = vmatprep.subr.bf16.mxu0 0
    %315 = vmatpush1.bf16.msra.mxu0 0
    %316 = vmatprep.subr.bf16.mxu0 0
    %317 = vmatpush1.bf16.msra.mxu0 0
    %318 = vmatprep.subr.bf16.mxu0 0
    %319 = vmatpush1.bf16.msra.mxu0 0
    %320 = vmatprep.subr.bf16.mxu0 0
    %321 = vmatpush1.bf16.msra.mxu0 0
    %322 = vmatprep.subr.bf16.mxu0 0
    %323 = vmatpush1.bf16.msra.mxu0 0
    %324 = vmatprep.mubr.bf16.mxu0 0
    %325 = vmatmul.mubr.bf16.gmra.mrb[0].mxu0 %v226
    %v326 = vpop.f32.mrb[0].mxu0
    %v327 = vadd.f32 0.0, %v326
    %v328 = vpop.f32.mrb[0].mxu0
    %v329 = vpop.f32.mrb[0].mxu0
    %v330 = vadd.f32 0.0, %v329
    %v331 = vpop.f32.mrb[0].mxu0
    %332 = vdwg.mxu0
    %v333 = vpack.c.bf16 %v330, %v327
    %s334 = scalar_lea.vmem %s3, 1
    %v335 = vld [vmem:[%s334] sm:$0x1]
    %v337 = vlaneseq
    %v338 = vshrl.u32 %v337, 7
    %v339 = vsub.s32 0, %v338
    %v340 = vrot.slane %v335, %v339
    %342 = vmatprep.subr.bf16.mxu0 0
    %343 = vmatpush1.bf16.msra.mxu0 %v333
    %344 = vmatprep.subr.bf16.mxu0 0
    %345 = vmatpush1.bf16.msra.mxu0 0
    %346 = vmatprep.subr.bf16.mxu0 0
    %347 = vmatpush1.bf16.msra.mxu0 0
    %348 = vmatprep.subr.bf16.mxu0 0
    %349 = vmatpush1.bf16.msra.mxu0 0
    %350 = vmatprep.subr.bf16.mxu0 0
    %351 = vmatpush1.bf16.msra.mxu0 0
    %352 = vmatprep.subr.bf16.mxu0 0
    %353 = vmatpush1.bf16.msra.mxu0 0
    %354 = vmatprep.subr.bf16.mxu0 0
    %355 = vmatpush1.bf16.msra.mxu0 0
    %356 = vmatprep.subr.bf16.mxu0 0
    %357 = vmatpush1.bf16.msra.mxu0 0
    %358 = vmatprep.subr.bf16.mxu0 0
    %359 = vmatpush1.bf16.msra.mxu0 0
    %360 = vmatprep.subr.bf16.mxu0 0
    %361 = vmatpush1.bf16.msra.mxu0 0
    %362 = vmatprep.subr.bf16.mxu0 0
    %363 = vmatpush1.bf16.msra.mxu0 0
    %364 = vmatprep.subr.bf16.mxu0 0
    %365 = vmatpush1.bf16.msra.mxu0 0
    %366 = vmatprep.subr.bf16.mxu0 0
    %367 = vmatpush1.bf16.msra.mxu0 0
    %368 = vmatprep.subr.bf16.mxu0 0
    %369 = vmatpush1.bf16.msra.mxu0 0
    %370 = vmatprep.subr.bf16.mxu0 0
    %371 = vmatpush1.bf16.msra.mxu0 0
    %372 = vmatprep.subr.bf16.mxu0 0
    %373 = vmatpush1.bf16.msra.mxu0 0
    %374 = vmatprep.mubr.bf16.mxu0 0
    %375 = vmatmul.mubr.bf16.gmra.mrb[0].mxu0 %v181
    %v376 = vpop.f32.mrb[0].mxu0
    %v377 = vadd.f32 %v340, %v376
    %v378 = vpop.f32.mrb[0].mxu0
    %v379 = vpop.f32.mrb[0].mxu0
    %v380 = vadd.f32 %v340, %v379
    %v381 = vpop.f32.mrb[0].mxu0
    %382 = vdwg.mxu0
    %v383 = vmax.f32 %v377, 0.0
    %v384 = vmax.f32 %v380, 0.0
    %v385 = vpack.c.bf16 %v384, %v383
    %s386 = scalar_lea.vmem [#allocation7], 128
    %v387 = vld [vmem:[%s386] sm:$0xf]
    %v388 = vld [vmem:[%s386 + $0x4] sm:$0xf]
    %v389 = vld [vmem:[%s386 + $0x8] sm:$0xf]
    %v390 = vld [vmem:[%s386 + $0xc] sm:$0xf]
    %v391 = vld [vmem:[%s386 + $0x10] sm:$0xf]
    %v392 = vld [vmem:[%s386 + $0x14] sm:$0xf]
    %v393 = vld [vmem:[%s386 + $0x18] sm:$0xf]
    %v394 = vld [vmem:[%s386 + $0x1c] sm:$0xf]
    %v395 = vld [vmem:[%s386 + $0x20] sm:$0xf]
    %v396 = vld [vmem:[%s386 + $0x24] sm:$0xf]
    %v397 = vld [vmem:[%s386 + $0x28] sm:$0xf]
    %v398 = vld [vmem:[%s386 + $0x2c] sm:$0xf]
    %v399 = vld [vmem:[%s386 + $0x30] sm:$0xf]
    %v400 = vld [vmem:[%s386 + $0x34] sm:$0xf]
    %v401 = vld [vmem:[%s386 + $0x38] sm:$0xf]
    %v402 = vld [vmem:[%s386 + $0x3c] sm:$0xf]
    %v419 = vunpack.c.l.b16 %v387
    %v420 = vunpack.c.l.b16 %v388
    %v421 = vunpack.c.l.b16 %v389
    %v422 = vunpack.c.l.b16 %v390
    %v423 = vunpack.c.l.b16 %v391
    %v424 = vunpack.c.l.b16 %v392
    %v425 = vunpack.c.l.b16 %v393
    %v426 = vunpack.c.l.b16 %v394
    %v427 = vunpack.c.l.b16 %v395
    %v428 = vunpack.c.l.b16 %v396
    %v429 = vunpack.c.l.b16 %v397
    %v430 = vunpack.c.l.b16 %v398
    %v431 = vunpack.c.l.b16 %v399
    %v432 = vunpack.c.l.b16 %v400
    %v433 = vunpack.c.l.b16 %v401
    %v434 = vunpack.c.l.b16 %v402
    %v435 = vpack.c.b16 %v420, %v419
    %v436 = vpack.c.b16 %v422, %v421
    %v437 = vpack.c.b16 %v424, %v423
    %v438 = vpack.c.b16 %v426, %v425
    %v439 = vpack.c.b16 %v428, %v427
    %v440 = vpack.c.b16 %v430, %v429
    %v441 = vpack.c.b16 %v432, %v431
    %v442 = vpack.c.b16 %v434, %v433
    %451 = vmatprep.subr.bf16.mxu0 0
    %452 = vmatpush1.bf16.msra.mxu0 %v435
    %453 = vmatprep.subr.bf16.mxu0 0
    %454 = vmatpush1.bf16.msra.mxu0 %v436
    %455 = vmatprep.subr.bf16.mxu0 0
    %456 = vmatpush1.bf16.msra.mxu0 %v437
    %457 = vmatprep.subr.bf16.mxu0 0
    %458 = vmatpush1.bf16.msra.mxu0 %v438
    %459 = vmatprep.subr.bf16.mxu0 0
    %460 = vmatpush1.bf16.msra.mxu0 %v439
    %461 = vmatprep.subr.bf16.mxu0 0
    %462 = vmatpush1.bf16.msra.mxu0 %v440
    %463 = vmatprep.subr.bf16.mxu0 0
    %464 = vmatpush1.bf16.msra.mxu0 %v441
    %465 = vmatprep.subr.bf16.mxu0 0
    %466 = vmatpush1.bf16.msra.mxu0 %v442
    %467 = vmatprep.subr.bf16.mxu0 0
    %468 = vmatpush1.bf16.msra.mxu0 0
    %469 = vmatprep.subr.bf16.mxu0 0
    %470 = vmatpush1.bf16.msra.mxu0 0
    %471 = vmatprep.subr.bf16.mxu0 0
    %472 = vmatpush1.bf16.msra.mxu0 0
    %473 = vmatprep.subr.bf16.mxu0 0
    %474 = vmatpush1.bf16.msra.mxu0 0
    %475 = vmatprep.subr.bf16.mxu0 0
    %476 = vmatpush1.bf16.msra.mxu0 0
    %477 = vmatprep.subr.bf16.mxu0 0
    %478 = vmatpush1.bf16.msra.mxu0 0
    %479 = vmatprep.subr.bf16.mxu0 0
    %480 = vmatpush1.bf16.msra.mxu0 0
    %481 = vmatprep.subr.bf16.mxu0 0
    %482 = vmatpush1.bf16.msra.mxu0 0
    %483 = vmatprep.mubr.bf16.mxu0 0
    %484 = vmatmul.mubr.bf16.gmra.mrb[0].mxu0 %v385
    %v485 = vpop.f32.mrb[0].mxu0
    %v486 = vadd.f32 0.0, %v485
    %v487 = vpop.f32.mrb[0].mxu0
    %v488 = vpop.f32.mrb[0].mxu0
    %v489 = vadd.f32 0.0, %v488
    %v490 = vpop.f32.mrb[0].mxu0
    %491 = vdwg.mxu0
    %v492 = vpack.c.bf16 %v489, %v486
    %s493 = scalar_lea.vmem %s3, 2
    %v494 = vld [vmem:[%s493] sm:$0x1]
    %v496 = vlaneseq
    %v497 = vshrl.u32 %v496, 7
    %v498 = vsub.s32 0, %v497
    %v499 = vrot.slane %v494, %v498
    %501 = vmatprep.subr.bf16.mxu0 0
    %502 = vmatpush1.bf16.msra.mxu0 %v492
    %503 = vmatprep.subr.bf16.mxu0 0
    %504 = vmatpush1.bf16.msra.mxu0 0
    %505 = vmatprep.subr.bf16.mxu0 0
    %506 = vmatpush1.bf16.msra.mxu0 0
    %507 = vmatprep.subr.bf16.mxu0 0
    %508 = vmatpush1.bf16.msra.mxu0 0
    %509 = vmatprep.subr.bf16.mxu0 0
    %510 = vmatpush1.bf16.msra.mxu0 0
    %511 = vmatprep.subr.bf16.mxu0 0
    %512 = vmatpush1.bf16.msra.mxu0 0
    %513 = vmatprep.subr.bf16.mxu0 0
    %514 = vmatpush1.bf16.msra.mxu0 0
    %515 = vmatprep.subr.bf16.mxu0 0
    %516 = vmatpush1.bf16.msra.mxu0 0
    %517 = vmatprep.subr.bf16.mxu0 0
    %518 = vmatpush1.bf16.msra.mxu0 0
    %519 = vmatprep.subr.bf16.mxu0 0
    %520 = vmatpush1.bf16.msra.mxu0 0
    %521 = vmatprep.subr.bf16.mxu0 0
    %522 = vmatpush1.bf16.msra.mxu0 0
    %523 = vmatprep.subr.bf16.mxu0 0
    %524 = vmatpush1.bf16.msra.mxu0 0
    %525 = vmatprep.subr.bf16.mxu0 0
    %526 = vmatpush1.bf16.msra.mxu0 0
    %527 = vmatprep.subr.bf16.mxu0 0
    %528 = vmatpush1.bf16.msra.mxu0 0
    %529 = vmatprep.subr.bf16.mxu0 0
    %530 = vmatpush1.bf16.msra.mxu0 0
    %531 = vmatprep.subr.bf16.mxu0 0
    %532 = vmatpush1.bf16.msra.mxu0 0
    %533 = vmatprep.mubr.bf16.mxu0 0
    %534 = vmatmul.mubr.bf16.gmra.mrb[0].mxu0 %v181
    %v535 = vpop.f32.mrb[0].mxu0
    %v536 = vadd.f32 %v499, %v535
    %v537 = vpop.f32.mrb[0].mxu0
    %v538 = vpop.f32.mrb[0].mxu0
    %v539 = vadd.f32 %v499, %v538
    %v540 = vpop.f32.mrb[0].mxu0
    %541 = vdwg.mxu0
    %v542 = vmax.f32 %v536, 0.0
    %v543 = vmax.f32 %v539, 0.0
    %v544 = vpack.c.bf16 %v543, %v542
    %s545 = scalar_lea.vmem [#allocation7], 192
    %v546 = vld [vmem:[%s545] sm:$0xf]
    %v547 = vld [vmem:[%s545 + $0x4] sm:$0xf]
    %v548 = vld [vmem:[%s545 + $0x8] sm:$0xf]
    %v549 = vld [vmem:[%s545 + $0xc] sm:$0xf]
    %v550 = vld [vmem:[%s545 + $0x10] sm:$0xf]
    %v551 = vld [vmem:[%s545 + $0x14] sm:$0xf]
    %v552 = vld [vmem:[%s545 + $0x18] sm:$0xf]
    %v553 = vld [vmem:[%s545 + $0x1c] sm:$0xf]
    %v554 = vld [vmem:[%s545 + $0x20] sm:$0xf]
    %v555 = vld [vmem:[%s545 + $0x24] sm:$0xf]
    %v556 = vld [vmem:[%s545 + $0x28] sm:$0xf]
    %v557 = vld [vmem:[%s545 + $0x2c] sm:$0xf]
    %v558 = vld [vmem:[%s545 + $0x30] sm:$0xf]
    %v559 = vld [vmem:[%s545 + $0x34] sm:$0xf]
    %v560 = vld [vmem:[%s545 + $0x38] sm:$0xf]
    %v561 = vld [vmem:[%s545 + $0x3c] sm:$0xf]
    %v578 = vunpack.c.l.b16 %v546
    %v579 = vunpack.c.l.b16 %v547
    %v580 = vunpack.c.l.b16 %v548
    %v581 = vunpack.c.l.b16 %v549
    %v582 = vunpack.c.l.b16 %v550
    %v583 = vunpack.c.l.b16 %v551
    %v584 = vunpack.c.l.b16 %v552
    %v585 = vunpack.c.l.b16 %v553
    %v586 = vunpack.c.l.b16 %v554
    %v587 = vunpack.c.l.b16 %v555
    %v588 = vunpack.c.l.b16 %v556
    %v589 = vunpack.c.l.b16 %v557
    %v590 = vunpack.c.l.b16 %v558
    %v591 = vunpack.c.l.b16 %v559
    %v592 = vunpack.c.l.b16 %v560
    %v593 = vunpack.c.l.b16 %v561
    %v594 = vpack.c.b16 %v579, %v578
    %v595 = vpack.c.b16 %v581, %v580
    %v596 = vpack.c.b16 %v583, %v582
    %v597 = vpack.c.b16 %v585, %v584
    %v598 = vpack.c.b16 %v587, %v586
    %v599 = vpack.c.b16 %v589, %v588
    %v600 = vpack.c.b16 %v591, %v590
    %v601 = vpack.c.b16 %v593, %v592
    %610 = vmatprep.subr.bf16.mxu0 0
    %611 = vmatpush1.bf16.msra.mxu0 %v594
    %612 = vmatprep.subr.bf16.mxu0 0
    %613 = vmatpush1.bf16.msra.mxu0 %v595
    %614 = vmatprep.subr.bf16.mxu0 0
    %615 = vmatpush1.bf16.msra.mxu0 %v596
    %616 = vmatprep.subr.bf16.mxu0 0
    %617 = vmatpush1.bf16.msra.mxu0 %v597
    %618 = vmatprep.subr.bf16.mxu0 0
    %619 = vmatpush1.bf16.msra.mxu0 %v598
    %620 = vmatprep.subr.bf16.mxu0 0
    %621 = vmatpush1.bf16.msra.mxu0 %v599
    %622 = vmatprep.subr.bf16.mxu0 0
    %623 = vmatpush1.bf16.msra.mxu0 %v600
    %624 = vmatprep.subr.bf16.mxu0 0
    %625 = vmatpush1.bf16.msra.mxu0 %v601
    %626 = vmatprep.subr.bf16.mxu0 0
    %627 = vmatpush1.bf16.msra.mxu0 0
    %628 = vmatprep.subr.bf16.mxu0 0
    %629 = vmatpush1.bf16.msra.mxu0 0
    %630 = vmatprep.subr.bf16.mxu0 0
    %631 = vmatpush1.bf16.msra.mxu0 0
    %632 = vmatprep.subr.bf16.mxu0 0
    %633 = vmatpush1.bf16.msra.mxu0 0
    %634 = vmatprep.subr.bf16.mxu0 0
    %635 = vmatpush1.bf16.msra.mxu0 0
    %636 = vmatprep.subr.bf16.mxu0 0
    %637 = vmatpush1.bf16.msra.mxu0 0
    %638 = vmatprep.subr.bf16.mxu0 0
    %639 = vmatpush1.bf16.msra.mxu0 0
    %640 = vmatprep.subr.bf16.mxu0 0
    %641 = vmatpush1.bf16.msra.mxu0 0
    %642 = vmatprep.mubr.bf16.mxu0 0
    %643 = vmatmul.mubr.bf16.gmra.mrb[0].mxu0 %v544
    %v644 = vpop.f32.mrb[0].mxu0
    %v645 = vadd.f32 0.0, %v644
    %v646 = vpop.f32.mrb[0].mxu0
    %v647 = vpop.f32.mrb[0].mxu0
    %v648 = vadd.f32 0.0, %v647
    %v649 = vpop.f32.mrb[0].mxu0
    %650 = vdwg.mxu0
    %v651 = vpack.c.bf16 %v648, %v645
    %s652 = scalar_lea.vmem %s3, 3
    %v653 = vld [vmem:[%s652] sm:$0x1]
    %v655 = vlaneseq
    %v656 = vshrl.u32 %v655, 7
    %v657 = vsub.s32 0, %v656
    %v658 = vrot.slane %v653, %v657
    %660 = vmatprep.subr.bf16.mxu0 0
    %661 = vmatpush1.bf16.msra.mxu0 %v651
    %662 = vmatprep.subr.bf16.mxu0 0
    %663 = vmatpush1.bf16.msra.mxu0 0
    %664 = vmatprep.subr.bf16.mxu0 0
    %665 = vmatpush1.bf16.msra.mxu0 0
    %666 = vmatprep.subr.bf16.mxu0 0
    %667 = vmatpush1.bf16.msra.mxu0 0
    %668 = vmatprep.subr.bf16.mxu0 0
    %669 = vmatpush1.bf16.msra.mxu0 0
    %670 = vmatprep.subr.bf16.mxu0 0
    %671 = vmatpush1.bf16.msra.mxu0 0
    %672 = vmatprep.subr.bf16.mxu0 0
    %673 = vmatpush1.bf16.msra.mxu0 0
    %674 = vmatprep.subr.bf16.mxu0 0
    %675 = vmatpush1.bf16.msra.mxu0 0
    %676 = vmatprep.subr.bf16.mxu0 0
    %677 = vmatpush1.bf16.msra.mxu0 0
    %678 = vmatprep.subr.bf16.mxu0 0
    %679 = vmatpush1.bf16.msra.mxu0 0
    %680 = vmatprep.subr.bf16.mxu0 0
    %681 = vmatpush1.bf16.msra.mxu0 0
    %682 = vmatprep.subr.bf16.mxu0 0
    %683 = vmatpush1.bf16.msra.mxu0 0
    %684 = vmatprep.subr.bf16.mxu0 0
    %685 = vmatpush1.bf16.msra.mxu0 0
    %686 = vmatprep.subr.bf16.mxu0 0
    %687 = vmatpush1.bf16.msra.mxu0 0
    %688 = vmatprep.subr.bf16.mxu0 0
    %689 = vmatpush1.bf16.msra.mxu0 0
    %690 = vmatprep.subr.bf16.mxu0 0
    %691 = vmatpush1.bf16.msra.mxu0 0
    %692 = vmatprep.mubr.bf16.mxu0 0
    %693 = vmatmul.mubr.bf16.gmra.mrb[0].mxu0 %v181
    %v694 = vpop.f32.mrb[0].mxu0
    %v695 = vadd.f32 %v658, %v694
    %v696 = vpop.f32.mrb[0].mxu0
    %v697 = vpop.f32.mrb[0].mxu0
    %v698 = vadd.f32 %v658, %v697
    %v699 = vpop.f32.mrb[0].mxu0
    %700 = vdwg.mxu0
    %v701 = vmax.f32 %v695, 0.0
    %v702 = vmax.f32 %v698, 0.0
    %v703 = vpack.c.bf16 %v702, %v701
    %s704 = scalar_lea.vmem [#allocation7], 256
    %v705 = vld [vmem:[%s704] sm:$0xf]
    %v706 = vld [vmem:[%s704 + $0x4] sm:$0xf]
    %v707 = vld [vmem:[%s704 + $0x8] sm:$0xf]
    %v708 = vld [vmem:[%s704 + $0xc] sm:$0xf]
    %v709 = vld [vmem:[%s704 + $0x10] sm:$0xf]
    %v710 = vld [vmem:[%s704 + $0x14] sm:$0xf]
    %v711 = vld [vmem:[%s704 + $0x18] sm:$0xf]
    %v712 = vld [vmem:[%s704 + $0x1c] sm:$0xf]
    %v713 = vld [vmem:[%s704 + $0x20] sm:$0xf]
    %v714 = vld [vmem:[%s704 + $0x24] sm:$0xf]
    %v715 = vld [vmem:[%s704 + $0x28] sm:$0xf]
    %v716 = vld [vmem:[%s704 + $0x2c] sm:$0xf]
    %v717 = vld [vmem:[%s704 + $0x30] sm:$0xf]
    %v718 = vld [vmem:[%s704 + $0x34] sm:$0xf]
    %v719 = vld [vmem:[%s704 + $0x38] sm:$0xf]
    %v720 = vld [vmem:[%s704 + $0x3c] sm:$0xf]
    %v737 = vunpack.c.l.b16 %v705
    %v738 = vunpack.c.l.b16 %v706
    %v739 = vunpack.c.l.b16 %v707
    %v740 = vunpack.c.l.b16 %v708
    %v741 = vunpack.c.l.b16 %v709
    %v742 = vunpack.c.l.b16 %v710
    %v743 = vunpack.c.l.b16 %v711
    %v744 = vunpack.c.l.b16 %v712
    %v745 = vunpack.c.l.b16 %v713
    %v746 = vunpack.c.l.b16 %v714
    %v747 = vunpack.c.l.b16 %v715
    %v748 = vunpack.c.l.b16 %v716
    %v749 = vunpack.c.l.b16 %v717
    %v750 = vunpack.c.l.b16 %v718
    %v751 = vunpack.c.l.b16 %v719
    %v752 = vunpack.c.l.b16 %v720
    %v753 = vpack.c.b16 %v738, %v737
    %v754 = vpack.c.b16 %v740, %v739
    %v755 = vpack.c.b16 %v742, %v741
    %v756 = vpack.c.b16 %v744, %v743
    %v757 = vpack.c.b16 %v746, %v745
    %v758 = vpack.c.b16 %v748, %v747
    %v759 = vpack.c.b16 %v750, %v749
    %v760 = vpack.c.b16 %v752, %v751
    %769 = vmatprep.subr.bf16.mxu0 0
    %770 = vmatpush1.bf16.msra.mxu0 %v753
    %771 = vmatprep.subr.bf16.mxu0 0
    %772 = vmatpush1.bf16.msra.mxu0 %v754
    %773 = vmatprep.subr.bf16.mxu0 0
    %774 = vmatpush1.bf16.msra.mxu0 %v755
    %775 = vmatprep.subr.bf16.mxu0 0
    %776 = vmatpush1.bf16.msra.mxu0 %v756
    %777 = vmatprep.subr.bf16.mxu0 0
    %778 = vmatpush1.bf16.msra.mxu0 %v757
    %779 = vmatprep.subr.bf16.mxu0 0
    %780 = vmatpush1.bf16.msra.mxu0 %v758
    %781 = vmatprep.subr.bf16.mxu0 0
    %782 = vmatpush1.bf16.msra.mxu0 %v759
    %783 = vmatprep.subr.bf16.mxu0 0
    %784 = vmatpush1.bf16.msra.mxu0 %v760
    %785 = vmatprep.subr.bf16.mxu0 0
    %786 = vmatpush1.bf16.msra.mxu0 0
    %787 = vmatprep.subr.bf16.mxu0 0
    %788 = vmatpush1.bf16.msra.mxu0 0
    %789 = vmatprep.subr.bf16.mxu0 0
    %790 = vmatpush1.bf16.msra.mxu0 0
    %791 = vmatprep.subr.bf16.mxu0 0
    %792 = vmatpush1.bf16.msra.mxu0 0
    %793 = vmatprep.subr.bf16.mxu0 0
    %794 = vmatpush1.bf16.msra.mxu0 0
    %795 = vmatprep.subr.bf16.mxu0 0
    %796 = vmatpush1.bf16.msra.mxu0 0
    %797 = vmatprep.subr.bf16.mxu0 0
    %798 = vmatpush1.bf16.msra.mxu0 0
    %799 = vmatprep.subr.bf16.mxu0 0
    %800 = vmatpush1.bf16.msra.mxu0 0
    %801 = vmatprep.mubr.bf16.mxu0 0
    %802 = vmatmul.mubr.bf16.gmra.mrb[0].mxu0 %v703
    %v803 = vpop.f32.mrb[0].mxu0
    %v804 = vadd.f32 0.0, %v803
    %v805 = vpop.f32.mrb[0].mxu0
    %v806 = vpop.f32.mrb[0].mxu0
    %v807 = vadd.f32 0.0, %v806
    %v808 = vpop.f32.mrb[0].mxu0
    %809 = vdwg.mxu0
    %v810 = vpack.c.bf16 %v807, %v804
    %s811 = scalar_lea.vmem %s3, 4
    %v812 = vld [vmem:[%s811] sm:$0x1]
    %v814 = vlaneseq
    %v815 = vshrl.u32 %v814, 7
    %v816 = vsub.s32 0, %v815
    %v817 = vrot.slane %v812, %v816
    %819 = vmatprep.subr.bf16.mxu0 0
    %820 = vmatpush1.bf16.msra.mxu0 %v810
    %821 = vmatprep.subr.bf16.mxu0 0
    %822 = vmatpush1.bf16.msra.mxu0 0
    %823 = vmatprep.subr.bf16.mxu0 0
    %824 = vmatpush1.bf16.msra.mxu0 0
    %825 = vmatprep.subr.bf16.mxu0 0
    %826 = vmatpush1.bf16.msra.mxu0 0
    %827 = vmatprep.subr.bf16.mxu0 0
    %828 = vmatpush1.bf16.msra.mxu0 0
    %829 = vmatprep.subr.bf16.mxu0 0
    %830 = vmatpush1.bf16.msra.mxu0 0
    %831 = vmatprep.subr.bf16.mxu0 0
    %832 = vmatpush1.bf16.msra.mxu0 0
    %833 = vmatprep.subr.bf16.mxu0 0
    %834 = vmatpush1.bf16.msra.mxu0 0
    %835 = vmatprep.subr.bf16.mxu0 0
    %836 = vmatpush1.bf16.msra.mxu0 0
    %837 = vmatprep.subr.bf16.mxu0 0
    %838 = vmatpush1.bf16.msra.mxu0 0
    %839 = vmatprep.subr.bf16.mxu0 0
    %840 = vmatpush1.bf16.msra.mxu0 0
    %841 = vmatprep.subr.bf16.mxu0 0
    %842 = vmatpush1.bf16.msra.mxu0 0
    %843 = vmatprep.subr.bf16.mxu0 0
    %844 = vmatpush1.bf16.msra.mxu0 0
    %845 = vmatprep.subr.bf16.mxu0 0
    %846 = vmatpush1.bf16.msra.mxu0 0
    %847 = vmatprep.subr.bf16.mxu0 0
    %848 = vmatpush1.bf16.msra.mxu0 0
    %849 = vmatprep.subr.bf16.mxu0 0
    %850 = vmatpush1.bf16.msra.mxu0 0
    %851 = vmatprep.mubr.bf16.mxu0 0
    %852 = vmatmul.mubr.bf16.gmra.mrb[0].mxu0 %v181
    %v853 = vpop.f32.mrb[0].mxu0
    %v854 = vadd.f32 %v817, %v853
    %v855 = vpop.f32.mrb[0].mxu0
    %v856 = vpop.f32.mrb[0].mxu0
    %v857 = vadd.f32 %v817, %v856
    %v858 = vpop.f32.mrb[0].mxu0
    %859 = vdwg.mxu0
    %v860 = vmax.f32 %v854, 0.0
    %v861 = vmax.f32 %v857, 0.0
    %862 = vst [vmem:[#allocation8] sm:$0xff] %v860
    %863 = vst [vmem:[#allocation8 + $0x8] sm:$0xff] %v861
    // Predicated region
    $region30: #{tpu_custom_call.1} parent=1 // pred_check
      _
    $region31: #{tpu_custom_call.1} parent=1 // pred_check_branch
      %865 = sbr.rel (0) target = $region33
    $region32: #{tpu_custom_call.1} parent=1 // pred_region
      %s867 = ssub.s32 256, 256
      %868 = vsyncadd [#allocation4], %s867
      %s869 = sshll.u32 [#allocation8], 4
      %s870 = int_to_ptr.vmem [resolvable:$true] %s869
      %875 = dma.vmem_to_hbm [thread:$0]  %s870, 256, %s4, [#allocation4], 128, 128, 8
    $region33: #{tpu_custom_call.1} parent=1 // pred_fallthru
      _
    // Predicated region
    $region34: #{tpu_custom_call.1} parent=1 // pred_check
      _
    $region35: #{tpu_custom_call.1} parent=1 // pred_check_branch
      %877 = sbr.rel (0) target = $region37
    $region36: #{tpu_custom_call.1} parent=1 // pred_region
      %878 = dma.done [#allocation4], 256
    $region37: #{tpu_custom_call.1} parent=1 // pred_fallthru
      _
    %879 = vsyncpa [#allocation3], 1
    %880 = vsyncpa [#allocation6], 1
    %881 = vsyncpa [#allocation4], 1

</llo_original>
